<compile_context>
chip_gen: v5e
topology: v5e:2x2
jax: 0.10.0
libtpu: 0.0.40
codegen_flags: <defaults>
</compile_context>

<pallas_src>
import jax
import jax.numpy as jnp
from jax.experimental import pallas as pl
from jax.experimental.pallas import tpu as pltpu


# ----------------------------- kernel ---------------------------------------- #

def _invconv_kernel(x_ref, w_ref, out_ref):
    """1x1 conv over a lane-dense spatial tile.

    x_ref:   (C, T) VMEM tile, T a multiple of 256 (lane-dense, unmasked stores).
    w_ref:   (C, C) VMEM-resident weight.
    out_ref: (C, T) VMEM tile.

    One MXU matmul + one full-tile store; VALU/vst slots stay free for the DMA
    pipeline (the kernel is HBM-bound for any realistic C).
    """
    out_ref[...] = jnp.dot(
        w_ref[...], x_ref[...], preferred_element_type=jnp.float32
    ).astype(out_ref.dtype)


# --------------------------- params / weight --------------------------------- #

def init_params(key, num_features):
    """Deterministic re-implementation of InvertibleConv1x1.__init__ (LU=True)."""
    w_init = jnp.linalg.qr(
        jax.random.normal(key, (num_features, num_features), dtype=jnp.float32)
    )[0]
    p, l, u = jax.scipy.linalg.lu(w_init)        # w_init = p @ l @ u
    s = jnp.diag(u)
    sign_s = jnp.sign(s)
    log_s = jnp.log(jnp.abs(s))
    u = jnp.triu(u, k=1)
    return dict(
        p=p.astype(jnp.float32),
        l=l.astype(jnp.float32),
        u=u.astype(jnp.float32),
        log_s=log_s.astype(jnp.float32),
        sign_s=sign_s.astype(jnp.float32),
    )


def get_weight(params):
    """w = P @ (L @ U), exactly as get_weight(reverse=False). Tiny CxC glue."""
    C = params["p"].shape[0]
    eye = jnp.eye(C, dtype=jnp.float32)
    l_mask = jnp.tril(jnp.ones((C, C), jnp.float32), -1)
    l_full = params["l"] * l_mask + eye
    u_full = params["u"] * l_mask.T + jnp.diag(
        params["sign_s"] * jnp.exp(params["log_s"])
    )
    return params["p"] @ (l_full @ u_full)       # (C_out, C_in)
# TODO(synk): reverse=True path (double-precision torch.inverse of L/U) not implemented.


# ------------------------------ tiling --------------------------------------- #

_LANE = 256  # lane-dense and MXU(256)-aligned tile granularity


def _round_up(x, m):
    return -(-x // m) * m


def _vmem_capacity_bytes():
    """Per-TC VMEM capacity (64 MiB on v7x, 128 MiB on v5e/v6e); safe fallback."""
    try:
        cap = int(pltpu.get_tpu_info().vmem_capacity_bytes)
        if cap > 0:
            return cap
    except Exception:
        pass
    return 64 * 1024 * 1024


def _choose_tiling(n, c, hw, itemsize, vmem_cap):
    """Pick (T, HW_padded) with T a multiple of 256 dividing HW_padded.

    Targets ~1–4 MiB per (C, T) block so DMA efficiency sits near the HBM
    roofline, while keeping the double-buffered in/out footprint well inside
    the per-generation VMEM budget, and keeping enough grid steps for
    megacore sharding / pipeline depth.
    """
    hw_aligned = _round_up(hw, _LANE)

    # Per-block byte target: 4 MiB, but never more than ~1/16 of VMEM
    # (footprint = 2 in-bufs + 2 out-bufs => ~1/4 of VMEM at most).
    target_block_bytes = min(4 * 1024 * 1024, max(512 * 1024, vmem_cap // 16))

    t = (target_block_bytes // (itemsize * c)) // _LANE * _LANE
    t = max(_LANE, t)
    t = min(t, hw_aligned)

    hw_padded = _round_up(hw_aligned, t)

    # Keep >= ~8 total grid steps (pipeline depth + both v7x TensorCores busy),
    # as long as T stays a multiple of 256.  Halving T preserves divisibility.
    while n * (hw_padded // t) < 8 and t % (2 * _LANE) == 0:
        t //= 2

    return t, hw_padded


# ------------------------------ wrapper --------------------------------------- #

def invertible_conv1x1_forward(x_nchw, params, logdet, stream_bf16=False):
    """Forward (reverse=False): (conv1x1(x, w), logdet + sum(log_s)*H*W)."""
    w = get_weight(params)                       # (C_out, C_in), f32

    N, C, H, W = x_nchw.shape
    HW = H * W
    num_pixels = HW                              # util.count_pixels(input)

    io_dtype = jnp.bfloat16 if stream_bf16 else jnp.float32
    itemsize = jnp.dtype(io_dtype).itemsize

    vmem_cap = _vmem_capacity_bytes()
    T, HW_padded = _choose_tiling(N, C, HW, itemsize, vmem_cap)

    # Free view: keep NCHW ordering, flatten spatial dims into the lane axis.
    x3d = x_nchw.reshape(N, C, HW).astype(io_dtype)
    if HW_padded != HW:
        # Cheap for a mem-bound op; keeps every block lane-dense & unmasked.
        x3d = jnp.pad(x3d, ((0, 0), (0, 0), (0, HW_padded - HW)))

    grid = (N, HW_padded // T)

    # NOTE: if DMA latency is still exposed at tiny C, pipeline_mode=pl.Buffered(3)
    # on x_spec is the next knob; 2-deep buffering is sufficient at these block sizes.
    x_spec = pl.BlockSpec((None, C, T), lambda n, s: (n, 0, s))
    w_spec = pl.BlockSpec((C, C), lambda n, s: (0, 0))           # VMEM-resident
    out_spec = pl.BlockSpec((None, C, T), lambda n, s: (n, 0, s))

    # VMEM budget: 2x double-buffered (C,T) blocks in + out, plus the weight.
    block_bytes = itemsize * C * T
    pipeline_bytes = 4 * block_bytes + 4 * C * C
    vmem_limit = int(min(vmem_cap, max(32 * 1024 * 1024, 2 * pipeline_bytes)))

    cost = pl.CostEstimate(
        flops=2 * N * HW_padded * C * C,
        transcendentals=0,
        bytes_accessed=itemsize * (2 * N * C * HW_padded) + 4 * C * C,
    )

    out3d = pl.pallas_call(
        _invconv_kernel,
        grid=grid,
        in_specs=[x_spec, w_spec],
        out_specs=out_spec,
        out_shape=jax.ShapeDtypeStruct((N, C, HW_padded), io_dtype),
        compiler_params=pltpu.CompilerParams(
            dimension_semantics=("parallel", "parallel"),
            vmem_limit_bytes=vmem_limit,
        ),
        cost_estimate=cost,
    )(x3d, w.astype(io_dtype))

    if HW_padded != HW:
        out3d = out3d[:, :, :HW]
    out_nchw = out3d.reshape(N, C, H, W).astype(jnp.float32)

    # Scalar logdet math in plain JAX (O(C)+O(N); no reason to run in-kernel).
    dlogdet = jnp.sum(params["log_s"]) * jnp.float32(num_pixels)
    logdet_out = logdet.astype(jnp.float32) + dlogdet
    return out_nchw, logdet_out


# ------------------------------- demo ----------------------------------------- #

if __name__ == "__main__":
    key = jax.random.PRNGKey(0)
    k_w, k_x, k_x2 = jax.random.split(key, 3)

    num_features = 4
    N, C, H, W = 2, num_features, 16, 16

    params = init_params(k_w, num_features)
    x = jax.random.normal(k_x, (N, C, H, W), dtype=jnp.float32)
    logdet = jnp.zeros((N,), dtype=jnp.float32)

    out, logdet_out = invertible_conv1x1_forward(x, params, logdet)
    out = jax.block_until_ready(out)
    logdet_out = jax.block_until_ready(logdet_out)

    # Reference (plain JAX) check of the same forward semantics.
    w_ref = get_weight(params)
    out_ref = jnp.einsum("oi,nihw->nohw", w_ref, x)
    dlogdet_ref = jnp.sum(params["log_s"]) * (H * W)
    logdet_ref = logdet + dlogdet_ref

    assert out.shape == (N, C, H, W) and out.dtype == jnp.float32
    assert jnp.allclose(out, out_ref, atol=1e-4, rtol=1e-4)
    assert jnp.allclose(logdet_out, logdet_ref, atol=1e-4, rtol=1e-4)

    # Non-128-multiple spatial size: exercises the pad-and-slice path.
    H2, W2 = 10, 10
    x2 = jax.random.normal(k_x2, (N, C, H2, W2), dtype=jnp.float32)
    out2, logdet_out2 = invertible_conv1x1_forward(x2, params, logdet)
    out2 = jax.block_until_ready(out2)
    out2_ref = jnp.einsum("oi,nihw->nohw", w_ref, x2)
    logdet2_ref = logdet + jnp.sum(params["log_s"]) * (H2 * W2)

    assert out2.shape == (N, C, H2, W2)
    assert jnp.allclose(out2, out2_ref, atol=1e-4, rtol=1e-4)
    assert jnp.allclose(logdet_out2, logdet2_ref, atol=1e-4, rtol=1e-4)

    print("KERNEL_OK")
</pallas_src>

<mosaic_0001>
module attributes {stable_mosaic.version = 11 : i64} {
  func.func @_invconv_kernel(%arg0: i32, %arg1: i32, %arg2: memref<1x4x256xf32, #tpu.memory_space<vmem>>, %arg3: memref<4x4xf32, #tpu.memory_space<vmem>>, %arg4: memref<1x4x256xf32, #tpu.memory_space<vmem>>) attributes {dimension_semantics = [#tpu.dimension_semantics<parallel>, #tpu.dimension_semantics<parallel>], iteration_bounds = array<i64: 2, 1>, scalar_prefetch = 0 : i64, scratch_operands = 0 : i64, tpu.core_type = #tpu.core_type<tc>, window_params = [{transform_indices = @transform_0, window_bounds = array<i64: 1, 4, 256>}, {pipeline_mode = #tpu.pipeline_mode<synchronous>, transform_indices = @transform_1, window_bounds = array<i64: 4, 4>}, {transform_indices = @transform_2, window_bounds = array<i64: 1, 4, 256>}]} {
    %c0 = arith.constant 0 : index
    %c0_0 = arith.constant 0 : index
    %0 = vector.load %arg3[%c0, %c0_0] : memref<4x4xf32, #tpu.memory_space<vmem>>, vector<4x4xf32>
    %c0_1 = arith.constant 0 : index
    %c0_2 = arith.constant 0 : index
    %c0_3 = arith.constant 0 : index
    %1 = vector.load %arg2[%c0_1, %c0_2, %c0_3] : memref<1x4x256xf32, #tpu.memory_space<vmem>>, vector<1x4x256xf32>
    %2 = vector.shape_cast %1 : vector<1x4x256xf32> to vector<4x256xf32>
    %cst = arith.constant dense<0.000000e+00> : vector<4x256xf32>
    %3 = tpu.matmul %0, %2, %cst {dimension_numbers = #tpu.dot_dimension_numbers<[1], [0], [0], [1], [0, 0, 1, 1], [], []>} : vector<4x4xf32>, vector<4x256xf32>, vector<4x256xf32> -> vector<4x256xf32>
    %c0_4 = arith.constant 0 : index
    %c0_5 = arith.constant 0 : index
    %c0_6 = arith.constant 0 : index
    %4 = vector.load %arg4[%c0_4, %c0_5, %c0_6] : memref<1x4x256xf32, #tpu.memory_space<vmem>>, vector<1x4x256xf32>
    %5 = vector.shape_cast %4 : vector<1x4x256xf32> to vector<4x256xf32>
    %6 = vector.shape_cast %3 : vector<4x256xf32> to vector<1x4x256xf32>
    tpu.vector_store %arg4[%c0_4, %c0_5, %c0_6], %6 {strides = array<i32>} : memref<1x4x256xf32, #tpu.memory_space<vmem>>, vector<1x4x256xf32>,
    return
  }
  func.func @transform_0(%arg0: i32, %arg1: i32) -> (i32, i32, i32) {
    %c0_i32 = arith.constant 0 : i32
    %c0_i32_0 = arith.constant 0 : i32
    return %arg0, %c0_i32, %arg1 : i32, i32, i32
  }
  func.func @transform_1(%arg0: i32, %arg1: i32) -> (i32, i32) {
    %c0_i32 = arith.constant 0 : i32
    %c0_i32_0 = arith.constant 0 : i32
    %c0_i32_1 = arith.constant 0 : i32
    return %c0_i32, %c0_i32_0 : i32, i32
  }
  func.func @transform_2(%arg0: i32, %arg1: i32) -> (i32, i32, i32) {
    %c0_i32 = arith.constant 0 : i32
    %c0_i32_0 = arith.constant 0 : i32
    return %arg0, %c0_i32, %arg1 : i32, i32, i32
  }
}

</mosaic_0001>

<llo_original>
// kernel: tpu_custom_call.1
$region0: #{tpu_custom_call.1}
  #allocation0 [shape = 'u32[]', space=smem, size = 0x4, offset = 0x4, fixed_abs, tag = 'smem constant byte address 0x4 - core index']
  #allocation1 [shape = 'u32[72,128]{1,0:T(1,128)}', space=vmem, size = 0x9000, scoped, tag = 'internal scratch']
  %s0 = inlined_call_operand.hbm [shape: f32[2,4,256], index: 0, kind: input, shape index: {}]
  %s1 = inlined_call_operand.hbm [shape: f32[4,4], index: 1, kind: input, shape index: {}]
  %s2 = inlined_call_operand.hbm [shape: f32[2,4,256], index: 2, kind: output, shape index: {}]
  %s3 = sld [smem:[#allocation0]]
  $region49: #{tpu_custom_call.1} parent=0
    _
  %s5 = ssub.s32 1, %s3
  %s6 = scalar_select 0, %s5, %s3
  $region1: #{tpu_custom_call.1} parent=0
    #allocation2 [shape = 'u8[8192]{0}', space=vmem, size = 0x2000, scoped, tag = 'input window, operand 0']
    #allocation3 [shape = 's32[2]{0}', space=sflag, size = 0x8, scoped, tag = 'scoped memory for tpu_custom_call.1']
    #allocation4 [shape = 's32[2]{0}', space=sflag, size = 0x8, scoped, tag = 'scoped memory for tpu_custom_call.1']
    #allocation5 [shape = 'u8[2048]{0}', space=vmem, size = 0x800, scoped, tag = 'input window, operand 1, single buffered']
    #allocation6 [shape = 's32[1]{0}', space=sflag, size = 0x4, scoped, tag = 'scoped memory for tpu_custom_call.1']
    #allocation7 [shape = 'u8[8192]{0}', space=vmem, size = 0x2000, scoped, tag = 'output window, operand 0']
    %7 = vsyncpa [#allocation3], 0
    %s8 = scalar_lea.sflag [#allocation3], 1
    %9 = vsyncpa %s8, 0
    %10 = vsyncpa [#allocation6], 0
    %11 = vsyncpa [#allocation4], 0
    %s12 = scalar_lea.sflag [#allocation4], 1
    %13 = vsyncpa %s12, 0
    loop: start=0, step=1, limit=4
    $region2: #{tpu_custom_call.1} parent=1 // loop_pre_header
      _
    $region3: #{tpu_custom_call.1} parent=1 // loop_header
      %s15 = sphi 0, %s19
      %p16 = scmp.ge.s32.totalorder %s15, 4
      %s22 = sphi 0, %s34
      %s23 = sphi 0, %s30
      %s24 = sphi 0, %s22
      %s25 = sphi 0, %s23
      %s26 = sphi 0, %s24
      %s27 = sphi 0, %s25
      %s39 = sphi 0, %s41
      %s42 = sphi 0, %s39
      %s43 = sphi 0, %s42
      %s59 = sphi 0, %s43
      %s63 = sphi 0, %s63
      %s65 = sphi 0, %s63
      %s66 = sphi 0, %s65
      %s80 = sphi 0, %s66
      %s88 = sphi 0, %s90
      %s91 = sphi 0, %s88
      %s92 = sphi 0, %s91
      %s108 = sphi 0, %s92
    $region4: #{tpu_custom_call.1} parent=1 // loop_header_branch
      %18 = sbr.rel (%p16) target = $region8
    $region5: #{tpu_custom_call.1} parent=1 // loop_body
      %s20 = ssub.s32 %s15, 1
      %s21 = ssub.s32 %s15, 2
      %s28 = sadd.s32 1, %s23
      %p29 = scmp.ge.s32.totalorder %s28, 1
      %s30 = scalar_select %p29, 0, %s28
      %s31 = sadd.s32 1, %s22
      %s32 = scalar_select %p29, %s31, %s22
      %p33 = scmp.ge.s32.totalorder %s32, 2
      %s34 = scalar_select %p33, 0, %s32
      %s35 = ssub.s32 %s22, %s34
      %s36 = ssub.s32 %s23, %s30
      %s37 = sor.u32 %s35, %s36
      %p38 = scmp.eq.s32.totalorder %s37, 0
      %s40 = sadd.s32 %s39, 1
      %s41 = scalar_select %p38, %s39, %s40
      %p44 = pneg %p38
      %p45 = scmp.eq.s32.totalorder %s15, 1
      %p46 = por %p44, %p45
      %p47 = scmp.ne.s32.totalorder %s39, %s42
      %p48 = scmp.eq.s32.totalorder %s15, 0
      %p49 = por %p47, %p48
      %p50 = scmp.ne.s32.totalorder %s39, %s42
      %p51 = scmp.eq.s32.totalorder %s20, 1
      %p52 = por %p50, %p51
      %p53 = scmp.ne.s32.totalorder %s42, %s43
      %p54 = scmp.eq.s32.totalorder %s20, 0
      %p55 = por %p53, %p54
      %p56 = scmp.ne.s32.totalorder %s42, %s43
      %p57 = scmp.eq.s32.totalorder %s21, 1
      %p58 = por %p56, %p57
      %p60 = scmp.ne.s32.totalorder %s43, %s59
      %p61 = scmp.eq.s32.totalorder %s21, 0
      %p62 = por %p60, %p61
      %s64 = sadd.s32 %s63, 1
      %p67 = scmp.eq.s32.totalorder %s15, 1
      %p68 = scmp.ne.s32.totalorder %s63, %s65
      %p69 = scmp.eq.s32.totalorder %s15, 0
      %p70 = por %p68, %p69
      %p71 = scmp.ne.s32.totalorder %s63, %s65
      %p72 = scmp.eq.s32.totalorder %s20, 1
      %p73 = por %p71, %p72
      %p74 = scmp.ne.s32.totalorder %s65, %s66
      %p75 = scmp.eq.s32.totalorder %s20, 0
      %p76 = por %p74, %p75
      %p77 = scmp.ne.s32.totalorder %s65, %s66
      %p78 = scmp.eq.s32.totalorder %s21, 1
      %p79 = por %p77, %p78
      %p81 = scmp.ne.s32.totalorder %s66, %s80
      %p82 = scmp.eq.s32.totalorder %s21, 0
      %p83 = por %p81, %p82
      %s84 = ssub.s32 %s22, %s34
      %s85 = ssub.s32 %s23, %s30
      %s86 = sor.u32 %s84, %s85
      %p87 = scmp.eq.s32.totalorder %s86, 0
      %s89 = sadd.s32 %s88, 1
      %s90 = scalar_select %p87, %s88, %s89
      %p93 = pneg %p87
      %p94 = scmp.eq.s32.totalorder %s15, 1
      %p95 = por %p93, %p94
      %p96 = scmp.ne.s32.totalorder %s88, %s91
      %p97 = scmp.eq.s32.totalorder %s15, 0
      %p98 = por %p96, %p97
      %p99 = scmp.ne.s32.totalorder %s88, %s91
      %p100 = scmp.eq.s32.totalorder %s20, 1
      %p101 = por %p99, %p100
      %p102 = scmp.ne.s32.totalorder %s91, %s92
      %p103 = scmp.eq.s32.totalorder %s20, 0
      %p104 = por %p102, %p103
      %p105 = scmp.ne.s32.totalorder %s91, %s92
      %p106 = scmp.eq.s32.totalorder %s21, 1
      %p107 = por %p105, %p106
      %p109 = scmp.ne.s32.totalorder %s92, %s108
      %p110 = scmp.eq.s32.totalorder %s21, 0
      %p111 = por %p109, %p110
      %p112 = scmp.le.s32.totalorder 1, %s15
      %p113 = scmp.lt.s32.totalorder %s15, 3
      %p114 = pnand %p112, %p113
      %p115 = pneg %p114
      // Predicated region
      $region9: #{tpu_custom_call.1} parent=5 // pred_check
        _
      $region10: #{tpu_custom_call.1} parent=5 // pred_check_branch
        %117 = sbr.rel (%p114) target = $region12
      $region11: #{tpu_custom_call.1} parent=5 // pred_region
        %s118 = ssub.s32 %s15, 1
        // Predicated region
        $region13: #{tpu_custom_call.1} parent=11 // pred_check
          %p119 = pneg %p76
        $region14: #{tpu_custom_call.1} parent=11 // pred_check_branch
          %121 = sbr.rel (%p119) target = $region16
        $region15: #{tpu_custom_call.1} parent=11 // pred_region
          %123 = vsyncadd [#allocation6], 0
          %s125 = sshll.u32 %s1, 4
          %s126 = int_to_ptr.hbm [resolvable:$true] %s125
          %s127 = sshll.u32 [#allocation5], 4
          %s128 = int_to_ptr.vmem [resolvable:$true] %s127
          %130 = dma.hbm_to_vmem [thread:$0]  %s126, 64, %s128, [#allocation6]
        $region16: #{tpu_custom_call.1} parent=11 // pred_fallthru
          _
      $region12: #{tpu_custom_call.1} parent=5 // pred_fallthru
        _
      %p131 = scmp.lt.s32.totalorder %s15, 2
      // Predicated region
      $region17: #{tpu_custom_call.1} parent=5 // pred_check
        %p132 = pneg %p131
      $region18: #{tpu_custom_call.1} parent=5 // pred_check_branch
        %134 = sbr.rel (%p132) target = $region20
      $region19: #{tpu_custom_call.1} parent=5 // pred_region
        // Predicated region
        $region21: #{tpu_custom_call.1} parent=19 // pred_check
          %p135 = pneg %p49
        $region22: #{tpu_custom_call.1} parent=19 // pred_check_branch
          %137 = sbr.rel (%p135) target = $region24
        $region23: #{tpu_custom_call.1} parent=19 // pred_region
          %s138 = sand.u32 %s39, 1
          %s139 = scalar_lea.sflag [#allocation3], %s138
          %s140 = sand.u32 %s39, 1
          %s141 = smul.addr %s140, 8
          %s142 = scalar_lea.vmem [#allocation2], %s141
          %s143 = smul.u32 2, %s23
          %145 = vsyncadd %s139, 0
          %s146 = smul.addr %s22, 2
          %s147 = sadd.s32 %s143, %s146
          %s148 = smul.addr %s147, 4
          %s149 = scalar_lea.hbm %s0, %s148
          %s151 = sshll.u32 %s149, 4
          %s152 = int_to_ptr.hbm [resolvable:$true] %s151
          %s153 = sshll.u32 %s142, 4
          %s154 = int_to_ptr.vmem [resolvable:$true] %s153
          %156 = dma.hbm_to_vmem [thread:$0]  %s152, 128, %s154, %s139
        $region24: #{tpu_custom_call.1} parent=19 // pred_fallthru
          _
      $region20: #{tpu_custom_call.1} parent=5 // pred_fallthru
        _
      %p157 = scmp.le.s32.totalorder 1, %s15
      %p158 = scmp.lt.s32.totalorder %s15, 3
      %p159 = pnand %p157, %p158
      %p160 = pneg %p159
      // Predicated region
      $region25: #{tpu_custom_call.1} parent=5 // pred_check
        _
      $region26: #{tpu_custom_call.1} parent=5 // pred_check_branch
        %162 = sbr.rel (%p159) target = $region28
      $region27: #{tpu_custom_call.1} parent=5 // pred_region
        %s163 = ssub.s32 %s15, 1
        %s164 = sand.u32 %s42, 1
        %s165 = scalar_lea.sflag [#allocation3], %s164
        %s166 = sand.u32 %s42, 1
        %s167 = smul.addr %s166, 8
        %s168 = scalar_lea.vmem [#allocation2], %s167
        // Predicated region
        $region29: #{tpu_custom_call.1} parent=27 // pred_check
          %p169 = pneg %p55
        $region30: #{tpu_custom_call.1} parent=27 // pred_check_branch
          %171 = sbr.rel (%p169) target = $region32
        $region31: #{tpu_custom_call.1} parent=27 // pred_region
          %173 = dma.done %s165, 128
        $region32: #{tpu_custom_call.1} parent=27 // pred_fallthru
          _
        // Predicated region
        $region33: #{tpu_custom_call.1} parent=27 // pred_check
          %p174 = pneg %p76
        $region34: #{tpu_custom_call.1} parent=27 // pred_check_branch
          %176 = sbr.rel (%p174) target = $region36
        $region35: #{tpu_custom_call.1} parent=27 // pred_region
          %178 = dma.done [#allocation6], 64
        $region36: #{tpu_custom_call.1} parent=27 // pred_fallthru
          _
        %s179 = sand.u32 %s42, 1
        %s180 = scalar_lea.sflag [#allocation3], %s179
        %s181 = sand.u32 %s42, 1
        %s182 = smul.addr %s181, 8
        %s183 = scalar_lea.vmem [#allocation2], %s182
        %p184 = pneg %p55
        %p185 = pneg %p52
        %p186 = pneg %p76
        %p187 = pneg %p73
        %p188 = pneg %p104
        %p189 = pneg %p101
        %s190 = sand.u32 %s91, 1
        %s191 = scalar_lea.sflag [#allocation4], %s190
        %s192 = sand.u32 %s91, 1
        %s193 = smul.addr %s192, 8
        %s194 = scalar_lea.vmem [#allocation7], %s193
        %s195 = smul.u32 2, %s25
        %s196 = smul.u32 2, %s25
        %v197 = vld [vmem:[#allocation5] sm:$0xf]
        %v198 = vld [vmem:[%s168] sm:$0xff]
        %200 = vst [vmem:[#allocation1] ss:$2 sm:$0xff] %v198
        %v201 = vld.sshfl [vmem:[#allocation1] sm:$0xff pattern:$0x75316420]
        %v202 = vld.sshfl [vmem:[#allocation1 + $0x8] sm:$0xff pattern:$0x75316420]
        %vm203 = vcmask 31744
        %v205 = vsel %vm203, %v197, 0
        %vm207 = vcmask 1043456
        %v208 = vsel %vm207, %v201, 0
        %v210 = vsel %vm207, %v202, 0
        %212 = vmatpush.msra.mxu0 0.0
        %213 = vmatpush.msra.mxu0 0.0
        %214 = vmatpush.msra.mxu0 0.0
        %215 = vmatpush.msra.mxu0 0.0
        %216 = vmatpush.msra.mxu0 0.0
        %217 = vmatpush.msra.mxu0 0.0
        %218 = vmatpush.msra.mxu0 0.0
        %219 = vmatpush.msra.mxu0 0.0
        %220 = vmatpush.msra.mxu0 0.0
        %221 = vmatpush.msra.mxu0 0.0
        %222 = vmatpush.msra.mxu0 0.0
        %223 = vmatpush.msra.mxu0 0.0
        %224 = vmatpush.msra.mxu0 0.0
        %225 = vmatpush.msra.mxu0 0.0
        %226 = vmatpush.msra.mxu0 0.0
        %227 = vmatpush.msra.mxu0 %v208
        %228 = vmatmul.f32.gmra.mxu0 %v205
        %v229 = vpop.f32.mrf.mxu0
        %v230 = vadd.f32 0.0, %v229
        %231 = vdwg.mxu0
        %232 = vmatpush.msra.mxu0 0.0
        %233 = vmatpush.msra.mxu0 0.0
        %234 = vmatpush.msra.mxu0 0.0
        %235 = vmatpush.msra.mxu0 0.0
        %236 = vmatpush.msra.mxu0 0.0
        %237 = vmatpush.msra.mxu0 0.0
        %238 = vmatpush.msra.mxu0 0.0
        %239 = vmatpush.msra.mxu0 0.0
        %240 = vmatpush.msra.mxu0 0.0
        %241 = vmatpush.msra.mxu0 0.0
        %242 = vmatpush.msra.mxu0 0.0
        %243 = vmatpush.msra.mxu0 0.0
        %244 = vmatpush.msra.mxu0 0.0
        %245 = vmatpush.msra.mxu0 0.0
        %246 = vmatpush.msra.mxu0 0.0
        %247 = vmatpush.msra.mxu0 %v210
        %248 = vmatmul.f32.gmra.mxu0 %v205
        %v249 = vpop.f32.mrf.mxu0
        %v250 = vadd.f32 0.0, %v249
        %251 = vdwg.mxu0
        %v254 = vrot.slane %v250, 4
        %v255 = vsel %vm207, %v230, %v254
        %257 = vst [vmem:[%s194] sm:$0xff] %v255
        %s258 = sand.u32 %s91, 1
        %s259 = scalar_lea.sflag [#allocation4], %s258
        %s260 = sand.u32 %s91, 1
        %s261 = smul.addr %s260, 8
        %s262 = scalar_lea.vmem [#allocation7], %s261
        // Predicated region
        $region37: #{tpu_custom_call.1} parent=27 // pred_check
          %p263 = pneg %p101
        $region38: #{tpu_custom_call.1} parent=27 // pred_check_branch
          %265 = sbr.rel (%p263) target = $region40
        $region39: #{tpu_custom_call.1} parent=27 // pred_region
          %s266 = smul.u32 2, %s25
          %268 = vsyncadd %s259, 0
          %s269 = smul.addr %s24, 2
          %s270 = sadd.s32 %s266, %s269
          %s271 = smul.addr %s270, 4
          %s272 = scalar_lea.hbm %s2, %s271
          %s274 = sshll.u32 %s262, 4
          %s275 = int_to_ptr.vmem [resolvable:$true] %s274
          %s276 = sshll.u32 %s272, 4
          %s277 = int_to_ptr.hbm [resolvable:$true] %s276
          %279 = dma.vmem_to_hbm [thread:$0]  %s275, 128, %s277, %s259
        $region40: #{tpu_custom_call.1} parent=27 // pred_fallthru
          _
      $region28: #{tpu_custom_call.1} parent=5 // pred_fallthru
        _
      %p280 = scmp.le.s32.totalorder 2, %s15
      // Predicated region
      $region41: #{tpu_custom_call.1} parent=5 // pred_check
        %p281 = pneg %p280
      $region42: #{tpu_custom_call.1} parent=5 // pred_check_branch
        %283 = sbr.rel (%p281) target = $region44
      $region43: #{tpu_custom_call.1} parent=5 // pred_region
        %s284 = ssub.s32 %s15, 2
        // Predicated region
        $region45: #{tpu_custom_call.1} parent=43 // pred_check
          %p285 = pneg %p107
        $region46: #{tpu_custom_call.1} parent=43 // pred_check_branch
          %287 = sbr.rel (%p285) target = $region48
        $region47: #{tpu_custom_call.1} parent=43 // pred_region
          %s288 = sand.u32 %s92, 1
          %s289 = scalar_lea.sflag [#allocation4], %s288
          %s290 = sand.u32 %s92, 1
          %s291 = smul.addr %s290, 8
          %s292 = scalar_lea.vmem [#allocation7], %s291
          %294 = dma.done %s289, 128
        $region48: #{tpu_custom_call.1} parent=43 // pred_fallthru
          _
      $region44: #{tpu_custom_call.1} parent=5 // pred_fallthru
        _
    $region6: #{tpu_custom_call.1} parent=1 // loop_footer
      %s19 = sadd.s32 1, %s15
    $region7: #{tpu_custom_call.1} parent=1 // loop_footer_branch
      %14 = sbr.rel target = $region3
    $region8: #{tpu_custom_call.1} parent=1 // loop_exit
      _
    %295 = vsyncpa [#allocation3], 1
    %s296 = scalar_lea.sflag [#allocation3], 1
    %297 = vsyncpa %s296, 1
    %298 = vsyncpa [#allocation6], 1
    %299 = vsyncpa [#allocation4], 1
    %s300 = scalar_lea.sflag [#allocation4], 1
    %301 = vsyncpa %s300, 1

</llo_original>
